<compile_context>
chip_gen: v7x
topology: tpu7x:2x2x1
jax: 0.10.0
libtpu: 0.0.40
codegen_flags: <defaults>
</compile_context>

<pallas_src>
import functools

import jax
import jax.numpy as jnp
from jax.experimental import pallas as pl
from jax.experimental.pallas import tpu as pltpu


def _clmodel_kernel(x_ref, w1_ref, b1_ref, w2_ref, b2_ref, w3_ref, b3_ref, o_ref):
    # x_ref: (TB, K) batch tile (f32 or bf16).  Weights are in PyTorch layout
    # (out_features, in_features); biases / w3 are (out_features, 1) columns so
    # they broadcast over the lane (batch) axis.
    x = x_ref[...]

    # fc1:  h1[h, n] = sum_k W1[h, k] * x[n, k]   -> (H1, TB)
    # (contract the last dim of both operands == matmul with transposed RHS;
    #  keeps the batch on the lane axis for everything downstream.)
    h1 = jax.lax.dot_general(
        w1_ref[...], x, (((1,), (1,)), ((), ())),
        preferred_element_type=jnp.float32)
    h1 = jnp.maximum(h1 + b1_ref[...], 0.0)

    # fc2: (H2, H1) @ (H1, TB) -> (H2, TB).  Cast the activation back to the
    # weight dtype so the bf16 path feeds the MXU at full rate; acc stays f32.
    h2 = jnp.dot(w2_ref[...], h1.astype(w2_ref.dtype),
                 preferred_element_type=jnp.float32)
    h2 = jnp.maximum(h2 + b2_ref[...], 0.0)

    # fc3 (out_features = 1): VPU multiply + cross-sublane reduce (XLU) rather
    # than a 1-column MXU matmul.
    z = jnp.sum(w3_ref[...].astype(jnp.float32) * h2, axis=0, keepdims=True)
    z = z + b3_ref[...]                               # (1, TB)

    # sigmoid(z) = 1 / (1 + exp(-z)); exp on EUP, reciprocal on EUP (approx).
    sig = pl.reciprocal(1.0 + jnp.exp(-z), approx=True)
    o_ref[...] = sig.astype(o_ref.dtype)


def _round_up(n, m):
    return (n + m - 1) // m * m


@functools.partial(jax.jit, static_argnames=("block_b", "use_bf16"))
def clmodel_forward(x, params, *, block_b=512, use_bf16=False):
    """x: (B, input_size) float32.  params: dict of w1,b1,w2,b2,w3,b3."""
    B, K = x.shape
    w1, b1 = params["w1"], params["b1"]
    w2, b2 = params["w2"], params["b2"]
    w3, b3 = params["w3"], params["b3"]

    mxu_dtype = jnp.bfloat16 if use_bf16 else jnp.float32

    # Batch tile: multiple of 128 so both the x tile (sublane axis) and the
    # lane-dense (1, TB) output tile satisfy the (8, 128) layout constraints.
    TB = min(_round_up(block_b, 128), _round_up(B, 128))
    B_pad = _round_up(B, TB)
    num_tiles = B_pad // TB

    xp = x if B_pad == B else jnp.pad(x, ((0, B_pad - B), (0, 0)))
    xp = xp.astype(mxu_dtype)
    w1c, w2c, w3c = (w.astype(mxu_dtype) for w in (w1, w2, w3))

    def resident(a):  # whole array in VMEM; same block every step -> no re-DMA
        return pl.BlockSpec(a.shape, lambda i: (0,) * a.ndim)

    out_row = pl.pallas_call(
        _clmodel_kernel,
        out_shape=jax.ShapeDtypeStruct((1, B_pad), jnp.float32),
        grid=(num_tiles,),
        in_specs=[
            pl.BlockSpec((TB, K), lambda i: (i, 0)),     # streamed batch tiles
            resident(w1c), resident(b1),
            resident(w2c), resident(b2),
            resident(w3c), resident(b3),
        ],
        out_specs=pl.BlockSpec((1, TB), lambda i: (0, i)),  # lane-dense output
        compiler_params=pltpu.CompilerParams(
            dimension_semantics=("parallel",),    # both TCs on v7x megacore
            vmem_limit_bytes=32 * 1024 * 1024,    # headroom for large tiles
        ),
    )(xp, w1c, b1, w2c, b2, w3c, b3)

    # (1, B_pad) lane-dense slab -> (B, 1) like nn.Linear(..., 1) + Sigmoid.
    return out_row[0, :B].reshape(B, 1)


def init_params(key, input_size, hidden_size1, hidden_size2):
    """nn.Linear-style uniform init.  Weights kept in PyTorch (out, in) layout;
    biases and the fc3 weight are stored as columns for lane-axis broadcast."""
    ks = jax.random.split(key, 6)

    def lin(kw, kb, fan_in, fan_out):
        bound = 1.0 / jnp.sqrt(jnp.float32(fan_in))
        w = jax.random.uniform(kw, (fan_out, fan_in), jnp.float32, -bound, bound)
        b = jax.random.uniform(kb, (fan_out, 1), jnp.float32, -bound, bound)
        return w, b

    w1, b1 = lin(ks[0], ks[1], input_size, hidden_size1)
    w2, b2 = lin(ks[2], ks[3], hidden_size1, hidden_size2)
    w3_row, b3 = lin(ks[4], ks[5], hidden_size2, 1)     # (1, H2), (1, 1)
    return {"w1": w1, "b1": b1, "w2": w2, "b2": b2,
            "w3": w3_row.T, "b3": b3}                   # w3 stored as (H2, 1)


def _reference(x, p):
    h1 = jnp.maximum(x @ p["w1"].T + p["b1"][:, 0], 0.0)
    h2 = jnp.maximum(h1 @ p["w2"].T + p["b2"][:, 0], 0.0)
    z = h2 @ p["w3"] + p["b3"][:, 0]
    return jax.nn.sigmoid(z)


if __name__ == "__main__":
    key = jax.random.PRNGKey(0)
    kx, kp = jax.random.split(key)

    batch, input_size, hidden1, hidden2 = 200, 32, 64, 32
    x = jax.random.normal(kx, (batch, input_size), jnp.float32)
    params = init_params(kp, input_size, hidden1, hidden2)

    ref = _reference(x, params)

    # f32 path.  block_b=128 -> 2 grid steps at this batch size: exercises the
    # batch-tile pipeline, resident weights and the padded tail.
    out = jax.block_until_ready(
        clmodel_forward(x, params, block_b=128, use_bf16=False))
    assert out.shape == (batch, 1)
    assert jnp.allclose(out, ref, atol=2e-3, rtol=2e-3), \
        float(jnp.max(jnp.abs(out - ref)))

    # bf16 MXU path (v6e/v7x): bf16 inputs/weights, f32 accumulation.
    out_bf16 = jax.block_until_ready(
        clmodel_forward(x, params, block_b=128, use_bf16=True))
    assert out_bf16.shape == (batch, 1)
    assert jnp.allclose(out_bf16, ref, atol=3e-2, rtol=3e-2), \
        float(jnp.max(jnp.abs(out_bf16 - ref)))

    print("KERNEL_OK")
</pallas_src>

<mosaic_0001>
module attributes {stable_mosaic.version = 11 : i64} {
  func.func @_clmodel_kernel(%arg0: i32, %arg1: memref<128x32xf32, #tpu.memory_space<vmem>>, %arg2: memref<64x32xf32, #tpu.memory_space<vmem>>, %arg3: memref<64x1xf32, #tpu.memory_space<vmem>>, %arg4: memref<32x64xf32, #tpu.memory_space<vmem>>, %arg5: memref<32x1xf32, #tpu.memory_space<vmem>>, %arg6: memref<32x1xf32, #tpu.memory_space<vmem>>, %arg7: memref<1x1xf32, #tpu.memory_space<vmem>>, %arg8: memref<1x128xf32, #tpu.memory_space<vmem>>) attributes {dimension_semantics = [#tpu.dimension_semantics<parallel>], iteration_bounds = array<i64: 2>, scalar_prefetch = 0 : i64, scratch_operands = 0 : i64, tpu.core_type = #tpu.core_type<tc>, window_params = [{transform_indices = @transform_0, window_bounds = array<i64: 128, 32>}, {pipeline_mode = #tpu.pipeline_mode<synchronous>, transform_indices = @transform_1, window_bounds = array<i64: 64, 32>}, {pipeline_mode = #tpu.pipeline_mode<synchronous>, transform_indices = @transform_2, window_bounds = array<i64: 64, 1>}, {pipeline_mode = #tpu.pipeline_mode<synchronous>, transform_indices = @transform_3, window_bounds = array<i64: 32, 64>}, {pipeline_mode = #tpu.pipeline_mode<synchronous>, transform_indices = @transform_4, window_bounds = array<i64: 32, 1>}, {pipeline_mode = #tpu.pipeline_mode<synchronous>, transform_indices = @transform_5, window_bounds = array<i64: 32, 1>}, {pipeline_mode = #tpu.pipeline_mode<synchronous>, transform_indices = @transform_6, window_bounds = array<i64: 1, 1>}, {transform_indices = @transform_7, window_bounds = array<i64: 1, 128>}]} {
    %c0 = arith.constant 0 : index
    %c0_0 = arith.constant 0 : index
    %0 = vector.load %arg1[%c0, %c0_0] : memref<128x32xf32, #tpu.memory_space<vmem>>, vector<128x32xf32>
    %c0_1 = arith.constant 0 : index
    %c0_2 = arith.constant 0 : index
    %1 = vector.load %arg2[%c0_1, %c0_2] : memref<64x32xf32, #tpu.memory_space<vmem>>, vector<64x32xf32>
    %cst = arith.constant dense<0.000000e+00> : vector<64x128xf32>
    %2 = tpu.matmul %1, %0, %cst {dimension_numbers = #tpu.dot_dimension_numbers<[1], [1], [0], [0], [0, 0, 1, 0], [], []>} : vector<64x32xf32>, vector<128x32xf32>, vector<64x128xf32> -> vector<64x128xf32>
    %c0_3 = arith.constant 0 : index
    %c0_4 = arith.constant 0 : index
    %3 = vector.load %arg3[%c0_3, %c0_4] : memref<64x1xf32, #tpu.memory_space<vmem>>, vector<64x1xf32>
    %4 = vector.broadcast %3 : vector<64x1xf32> to vector<64x128xf32>
    %5 = arith.addf %2, %4 : vector<64x128xf32>
    %cst_5 = arith.constant 0.000000e+00 : f32
    %6 = vector.broadcast %cst_5 : f32 to vector<64x128xf32>
    %7 = arith.maximumf %5, %6 : vector<64x128xf32>
    %c0_6 = arith.constant 0 : index
    %c0_7 = arith.constant 0 : index
    %8 = vector.load %arg4[%c0_6, %c0_7] : memref<32x64xf32, #tpu.memory_space<vmem>>, vector<32x64xf32>
    %cst_8 = arith.constant dense<0.000000e+00> : vector<32x128xf32>
    %9 = tpu.matmul %8, %7, %cst_8 {dimension_numbers = #tpu.dot_dimension_numbers<[1], [0], [0], [1], [0, 0, 1, 1], [], []>} : vector<32x64xf32>, vector<64x128xf32>, vector<32x128xf32> -> vector<32x128xf32>
    %c0_9 = arith.constant 0 : index
    %c0_10 = arith.constant 0 : index
    %10 = vector.load %arg5[%c0_9, %c0_10] : memref<32x1xf32, #tpu.memory_space<vmem>>, vector<32x1xf32>
    %11 = vector.broadcast %10 : vector<32x1xf32> to vector<32x128xf32>
    %12 = arith.addf %9, %11 : vector<32x128xf32>
    %cst_11 = arith.constant 0.000000e+00 : f32
    %13 = vector.broadcast %cst_11 : f32 to vector<32x128xf32>
    %14 = arith.maximumf %12, %13 : vector<32x128xf32>
    %c0_12 = arith.constant 0 : index
    %c0_13 = arith.constant 0 : index
    %15 = vector.load %arg6[%c0_12, %c0_13] : memref<32x1xf32, #tpu.memory_space<vmem>>, vector<32x1xf32>
    %16 = vector.broadcast %15 : vector<32x1xf32> to vector<32x128xf32>
    %17 = arith.mulf %16, %14 : vector<32x128xf32>
    %cst_14 = arith.constant dense<0.000000e+00> : vector<128xf32>
    %18 = vector.multi_reduction <add>, %17, %cst_14 [0] : vector<32x128xf32> to vector<128xf32>
    %19 = vector.shape_cast %18 : vector<128xf32> to vector<1x128xf32>
    %c0_15 = arith.constant 0 : index
    %c0_16 = arith.constant 0 : index
    %20 = vector.load %arg7[%c0_15, %c0_16] : memref<1x1xf32, #tpu.memory_space<vmem>>, vector<1x1xf32>
    %21 = vector.broadcast %20 : vector<1x1xf32> to vector<1x128xf32>
    %22 = arith.addf %19, %21 : vector<1x128xf32>
    %cst_17 = arith.constant 0.000000e+00 : f32
    %23 = vector.broadcast %cst_17 : f32 to vector<1x128xf32>
    %24 = arith.subf %23, %22 : vector<1x128xf32>
    %25 = math.exp %24 : vector<1x128xf32>
    %cst_18 = arith.constant 1.000000e+00 : f32
    %26 = vector.broadcast %cst_18 : f32 to vector<1x128xf32>
    %27 = arith.addf %26, %25 : vector<1x128xf32>
    %28 = tpu.reciprocal %27 {approx = true} : vector<1x128xf32> -> vector<1x128xf32>
    %c0_19 = arith.constant 0 : index
    %c0_20 = arith.constant 0 : index
    %29 = vector.load %arg8[%c0_19, %c0_20] : memref<1x128xf32, #tpu.memory_space<vmem>>, vector<1x128xf32>
    tpu.vector_store %arg8[%c0_19, %c0_20], %28 {strides = array<i32>} : memref<1x128xf32, #tpu.memory_space<vmem>>, vector<1x128xf32>,
    return
  }
  func.func @transform_0(%arg0: i32) -> (i32, i32) {
    %c0_i32 = arith.constant 0 : i32
    %c0_i32_0 = arith.constant 0 : i32
    return %arg0, %c0_i32 : i32, i32
  }
  func.func @transform_1(%arg0: i32) -> (i32, i32) {
    %c0_i32 = arith.constant 0 : i32
    %c0_i32_0 = arith.constant 0 : i32
    %c0_i32_1 = arith.constant 0 : i32
    return %c0_i32, %c0_i32_0 : i32, i32
  }
  func.func @transform_2(%arg0: i32) -> (i32, i32) {
    %c0_i32 = arith.constant 0 : i32
    %c0_i32_0 = arith.constant 0 : i32
    %c0_i32_1 = arith.constant 0 : i32
    return %c0_i32, %c0_i32_0 : i32, i32
  }
  func.func @transform_3(%arg0: i32) -> (i32, i32) {
    %c0_i32 = arith.constant 0 : i32
    %c0_i32_0 = arith.constant 0 : i32
    %c0_i32_1 = arith.constant 0 : i32
    return %c0_i32, %c0_i32_0 : i32, i32
  }
  func.func @transform_4(%arg0: i32) -> (i32, i32) {
    %c0_i32 = arith.constant 0 : i32
    %c0_i32_0 = arith.constant 0 : i32
    %c0_i32_1 = arith.constant 0 : i32
    return %c0_i32, %c0_i32_0 : i32, i32
  }
  func.func @transform_5(%arg0: i32) -> (i32, i32) {
    %c0_i32 = arith.constant 0 : i32
    %c0_i32_0 = arith.constant 0 : i32
    %c0_i32_1 = arith.constant 0 : i32
    return %c0_i32, %c0_i32_0 : i32, i32
  }
  func.func @transform_6(%arg0: i32) -> (i32, i32) {
    %c0_i32 = arith.constant 0 : i32
    %c0_i32_0 = arith.constant 0 : i32
    %c0_i32_1 = arith.constant 0 : i32
    return %c0_i32, %c0_i32_0 : i32, i32
  }
  func.func @transform_7(%arg0: i32) -> (i32, i32) {
    %c0_i32 = arith.constant 0 : i32
    %c0_i32_0 = arith.constant 0 : i32
    return %c0_i32, %arg0 : i32, i32
  }
}

</mosaic_0001>

<llo_original>
// kernel: clmodel_forward.1
$region0: #{clmodel_forward.1}
  #allocation0 [shape = 'u32[]', space=smem, size = 0x4, offset = 0x4, fixed_abs, tag = 'smem constant byte address 0x4 - core index']
  #allocation1 [shape = 'u32[144,128]{1,0:T(1,128)}', space=vmem, size = 0x12000, scoped, tag = 'internal scratch']
  #allocation2 [shape = 'f32[1,1]{1,0:T(1,128)S(1)}', space=vmem, size = 0x200, scoped, tag = 'scoped memory for clmodel_forward.1']
  %s0 = inlined_call_operand.vmem [shape: f32[256,32], index: 0, kind: input, shape index: {}]
  %s1 = inlined_call_operand.vmem [shape: f32[64,32], index: 1, kind: input, shape index: {}]
  %s2 = inlined_call_operand.vmem [shape: f32[64,1], index: 2, kind: input, shape index: {}]
  %s3 = inlined_call_operand.vmem [shape: f32[32,64], index: 3, kind: input, shape index: {}]
  %s4 = inlined_call_operand.vmem [shape: f32[32,1], index: 4, kind: input, shape index: {}]
  %s5 = inlined_call_operand.vmem [shape: f32[32,1], index: 5, kind: input, shape index: {}]
  %s6 = inlined_call_operand.<no memory space> [shape: f32[1,1], index: 6, kind: input, shape index: {}]
  %s7 = inlined_call_operand.vmem [shape: f32[1,256], index: 7, kind: output, shape index: {}]
  %s8 = sld [smem:[#allocation0]]
  $region61: #{clmodel_forward.1} parent=0
    _
  %s10 = ssub.s32 1, %s8
  %s11 = scalar_select 0, %s10, %s8
  %v12 = vstv %s6
  %13 = vst [vmem:[#allocation2] sm:$0x1] %v12
  loop: start=0, step=1, limit=4
  $region2: #{clmodel_forward.1} parent=0 // loop_pre_header
    _
  $region3: #{clmodel_forward.1} parent=0 // loop_header
    %s15 = sphi 0, %s19
    %p16 = scmp.ge.s32.totalorder %s15, 4
    %s25 = sphi 0, %s27
    %s28 = sphi 0, %s25
    %s29 = sphi 0, %s28
    %s45 = sphi 0, %s29
    %s49 = sphi 0, %s49
    %s51 = sphi 0, %s49
    %s52 = sphi 0, %s51
    %s66 = sphi 0, %s52
    %s70 = sphi 0, %s70
    %s72 = sphi 0, %s70
    %s73 = sphi 0, %s72
    %s87 = sphi 0, %s73
    %s91 = sphi 0, %s91
    %s93 = sphi 0, %s91
    %s94 = sphi 0, %s93
    %s108 = sphi 0, %s94
    %s112 = sphi 0, %s112
    %s114 = sphi 0, %s112
    %s115 = sphi 0, %s114
    %s129 = sphi 0, %s115
    %s133 = sphi 0, %s133
    %s135 = sphi 0, %s133
    %s136 = sphi 0, %s135
    %s150 = sphi 0, %s136
    %s154 = sphi 0, %s154
    %s156 = sphi 0, %s154
    %s157 = sphi 0, %s156
    %s171 = sphi 0, %s157
    %s177 = sphi 0, %s179
    %s180 = sphi 0, %s177
    %s181 = sphi 0, %s180
    %s197 = sphi 0, %s181
  $region4: #{clmodel_forward.1} parent=0 // loop_header_branch
    %18 = sbr.rel (%p16) target = $region8
  $region5: #{clmodel_forward.1} parent=0 // loop_body
    %s20 = ssub.s32 %s15, 1
    %s21 = ssub.s32 %s15, 2
    %s22 = sadd.s32 %s15, 1
    %s23 = ssub.s32 %s15, %s22
    %p24 = scmp.eq.s32.totalorder %s23, 0
    %s26 = sadd.s32 %s25, 1
    %s27 = scalar_select %p24, %s25, %s26
    %p30 = pneg %p24
    %p31 = scmp.eq.s32.totalorder %s15, 1
    %p32 = por %p30, %p31
    %p33 = scmp.ne.s32.totalorder %s25, %s28
    %p34 = scmp.eq.s32.totalorder %s15, 0
    %p35 = por %p33, %p34
    %p36 = scmp.ne.s32.totalorder %s25, %s28
    %p37 = scmp.eq.s32.totalorder %s20, 1
    %p38 = por %p36, %p37
    %p39 = scmp.ne.s32.totalorder %s28, %s29
    %p40 = scmp.eq.s32.totalorder %s20, 0
    %p41 = por %p39, %p40
    %p42 = scmp.ne.s32.totalorder %s28, %s29
    %p43 = scmp.eq.s32.totalorder %s21, 1
    %p44 = por %p42, %p43
    %p46 = scmp.ne.s32.totalorder %s29, %s45
    %p47 = scmp.eq.s32.totalorder %s21, 0
    %p48 = por %p46, %p47
    %s50 = sadd.s32 %s49, 1
    %p53 = scmp.eq.s32.totalorder %s15, 1
    %p54 = scmp.ne.s32.totalorder %s49, %s51
    %p55 = scmp.eq.s32.totalorder %s15, 0
    %p56 = por %p54, %p55
    %p57 = scmp.ne.s32.totalorder %s49, %s51
    %p58 = scmp.eq.s32.totalorder %s20, 1
    %p59 = por %p57, %p58
    %p60 = scmp.ne.s32.totalorder %s51, %s52
    %p61 = scmp.eq.s32.totalorder %s20, 0
    %p62 = por %p60, %p61
    %p63 = scmp.ne.s32.totalorder %s51, %s52
    %p64 = scmp.eq.s32.totalorder %s21, 1
    %p65 = por %p63, %p64
    %p67 = scmp.ne.s32.totalorder %s52, %s66
    %p68 = scmp.eq.s32.totalorder %s21, 0
    %p69 = por %p67, %p68
    %s71 = sadd.s32 %s70, 1
    %p74 = scmp.eq.s32.totalorder %s15, 1
    %p75 = scmp.ne.s32.totalorder %s70, %s72
    %p76 = scmp.eq.s32.totalorder %s15, 0
    %p77 = por %p75, %p76
    %p78 = scmp.ne.s32.totalorder %s70, %s72
    %p79 = scmp.eq.s32.totalorder %s20, 1
    %p80 = por %p78, %p79
    %p81 = scmp.ne.s32.totalorder %s72, %s73
    %p82 = scmp.eq.s32.totalorder %s20, 0
    %p83 = por %p81, %p82
    %p84 = scmp.ne.s32.totalorder %s72, %s73
    %p85 = scmp.eq.s32.totalorder %s21, 1
    %p86 = por %p84, %p85
    %p88 = scmp.ne.s32.totalorder %s73, %s87
    %p89 = scmp.eq.s32.totalorder %s21, 0
    %p90 = por %p88, %p89
    %s92 = sadd.s32 %s91, 1
    %p95 = scmp.eq.s32.totalorder %s15, 1
    %p96 = scmp.ne.s32.totalorder %s91, %s93
    %p97 = scmp.eq.s32.totalorder %s15, 0
    %p98 = por %p96, %p97
    %p99 = scmp.ne.s32.totalorder %s91, %s93
    %p100 = scmp.eq.s32.totalorder %s20, 1
    %p101 = por %p99, %p100
    %p102 = scmp.ne.s32.totalorder %s93, %s94
    %p103 = scmp.eq.s32.totalorder %s20, 0
    %p104 = por %p102, %p103
    %p105 = scmp.ne.s32.totalorder %s93, %s94
    %p106 = scmp.eq.s32.totalorder %s21, 1
    %p107 = por %p105, %p106
    %p109 = scmp.ne.s32.totalorder %s94, %s108
    %p110 = scmp.eq.s32.totalorder %s21, 0
    %p111 = por %p109, %p110
    %s113 = sadd.s32 %s112, 1
    %p116 = scmp.eq.s32.totalorder %s15, 1
    %p117 = scmp.ne.s32.totalorder %s112, %s114
    %p118 = scmp.eq.s32.totalorder %s15, 0
    %p119 = por %p117, %p118
    %p120 = scmp.ne.s32.totalorder %s112, %s114
    %p121 = scmp.eq.s32.totalorder %s20, 1
    %p122 = por %p120, %p121
    %p123 = scmp.ne.s32.totalorder %s114, %s115
    %p124 = scmp.eq.s32.totalorder %s20, 0
    %p125 = por %p123, %p124
    %p126 = scmp.ne.s32.totalorder %s114, %s115
    %p127 = scmp.eq.s32.totalorder %s21, 1
    %p128 = por %p126, %p127
    %p130 = scmp.ne.s32.totalorder %s115, %s129
    %p131 = scmp.eq.s32.totalorder %s21, 0
    %p132 = por %p130, %p131
    %s134 = sadd.s32 %s133, 1
    %p137 = scmp.eq.s32.totalorder %s15, 1
    %p138 = scmp.ne.s32.totalorder %s133, %s135
    %p139 = scmp.eq.s32.totalorder %s15, 0
    %p140 = por %p138, %p139
    %p141 = scmp.ne.s32.totalorder %s133, %s135
    %p142 = scmp.eq.s32.totalorder %s20, 1
    %p143 = por %p141, %p142
    %p144 = scmp.ne.s32.totalorder %s135, %s136
    %p145 = scmp.eq.s32.totalorder %s20, 0
    %p146 = por %p144, %p145
    %p147 = scmp.ne.s32.totalorder %s135, %s136
    %p148 = scmp.eq.s32.totalorder %s21, 1
    %p149 = por %p147, %p148
    %p151 = scmp.ne.s32.totalorder %s136, %s150
    %p152 = scmp.eq.s32.totalorder %s21, 0
    %p153 = por %p151, %p152
    %s155 = sadd.s32 %s154, 1
    %p158 = scmp.eq.s32.totalorder %s15, 1
    %p159 = scmp.ne.s32.totalorder %s154, %s156
    %p160 = scmp.eq.s32.totalorder %s15, 0
    %p161 = por %p159, %p160
    %p162 = scmp.ne.s32.totalorder %s154, %s156
    %p163 = scmp.eq.s32.totalorder %s20, 1
    %p164 = por %p162, %p163
    %p165 = scmp.ne.s32.totalorder %s156, %s157
    %p166 = scmp.eq.s32.totalorder %s20, 0
    %p167 = por %p165, %p166
    %p168 = scmp.ne.s32.totalorder %s156, %s157
    %p169 = scmp.eq.s32.totalorder %s21, 1
    %p170 = por %p168, %p169
    %p172 = scmp.ne.s32.totalorder %s157, %s171
    %p173 = scmp.eq.s32.totalorder %s21, 0
    %p174 = por %p172, %p173
    %s175 = ssub.s32 %s15, %s22
    %p176 = scmp.eq.s32.totalorder %s175, 0
    %s178 = sadd.s32 %s177, 1
    %s179 = scalar_select %p176, %s177, %s178
    %p182 = pneg %p176
    %p183 = scmp.eq.s32.totalorder %s15, 1
    %p184 = por %p182, %p183
    %p185 = scmp.ne.s32.totalorder %s177, %s180
    %p186 = scmp.eq.s32.totalorder %s15, 0
    %p187 = por %p185, %p186
    %p188 = scmp.ne.s32.totalorder %s177, %s180
    %p189 = scmp.eq.s32.totalorder %s20, 1
    %p190 = por %p188, %p189
    %p191 = scmp.ne.s32.totalorder %s180, %s181
    %p192 = scmp.eq.s32.totalorder %s20, 0
    %p193 = por %p191, %p192
    %p194 = scmp.ne.s32.totalorder %s180, %s181
    %p195 = scmp.eq.s32.totalorder %s21, 1
    %p196 = por %p194, %p195
    %p198 = scmp.ne.s32.totalorder %s181, %s197
    %p199 = scmp.eq.s32.totalorder %s21, 0
    %p200 = por %p198, %p199
    %p201 = scmp.le.s32.totalorder 1, %s15
    %p202 = scmp.lt.s32.totalorder %s15, 3
    %p203 = pnand %p201, %p202
    %p204 = pneg %p203
    // Predicated region
    $region9: #{clmodel_forward.1} parent=5 // pred_check
      _
    $region10: #{clmodel_forward.1} parent=5 // pred_check_branch
      %206 = sbr.rel (%p203) target = $region12
    $region11: #{clmodel_forward.1} parent=5 // pred_region
      %s207 = ssub.s32 %s15, 1
      // Predicated region
      $region13: #{clmodel_forward.1} parent=11 // pred_check
        %p208 = pneg %p62
      $region14: #{clmodel_forward.1} parent=11 // pred_check_branch
        %210 = sbr.rel (%p208) target = $region16
      $region15: #{clmodel_forward.1} parent=11 // pred_region
        _
      $region16: #{clmodel_forward.1} parent=11 // pred_fallthru
        _
      // Predicated region
      $region17: #{clmodel_forward.1} parent=11 // pred_check
        %p211 = pneg %p83
      $region18: #{clmodel_forward.1} parent=11 // pred_check_branch
        %213 = sbr.rel (%p211) target = $region20
      $region19: #{clmodel_forward.1} parent=11 // pred_region
        _
      $region20: #{clmodel_forward.1} parent=11 // pred_fallthru
        _
      // Predicated region
      $region21: #{clmodel_forward.1} parent=11 // pred_check
        %p214 = pneg %p104
      $region22: #{clmodel_forward.1} parent=11 // pred_check_branch
        %216 = sbr.rel (%p214) target = $region24
      $region23: #{clmodel_forward.1} parent=11 // pred_region
        _
      $region24: #{clmodel_forward.1} parent=11 // pred_fallthru
        _
      // Predicated region
      $region25: #{clmodel_forward.1} parent=11 // pred_check
        %p217 = pneg %p125
      $region26: #{clmodel_forward.1} parent=11 // pred_check_branch
        %219 = sbr.rel (%p217) target = $region28
      $region27: #{clmodel_forward.1} parent=11 // pred_region
        _
      $region28: #{clmodel_forward.1} parent=11 // pred_fallthru
        _
      // Predicated region
      $region29: #{clmodel_forward.1} parent=11 // pred_check
        %p220 = pneg %p146
      $region30: #{clmodel_forward.1} parent=11 // pred_check_branch
        %222 = sbr.rel (%p220) target = $region32
      $region31: #{clmodel_forward.1} parent=11 // pred_region
        _
      $region32: #{clmodel_forward.1} parent=11 // pred_fallthru
        _
      // Predicated region
      $region33: #{clmodel_forward.1} parent=11 // pred_check
        %p223 = pneg %p167
      $region34: #{clmodel_forward.1} parent=11 // pred_check_branch
        %225 = sbr.rel (%p223) target = $region36
      $region35: #{clmodel_forward.1} parent=11 // pred_region
        _
      $region36: #{clmodel_forward.1} parent=11 // pred_fallthru
        _
    $region12: #{clmodel_forward.1} parent=5 // pred_fallthru
      _
    %p226 = scmp.lt.s32.totalorder %s15, 2
    // Predicated region
    $region37: #{clmodel_forward.1} parent=5 // pred_check
      %p227 = pneg %p226
    $region38: #{clmodel_forward.1} parent=5 // pred_check_branch
      %229 = sbr.rel (%p227) target = $region40
    $region39: #{clmodel_forward.1} parent=5 // pred_region
      // Predicated region
      $region41: #{clmodel_forward.1} parent=39 // pred_check
        %p230 = pneg %p35
      $region42: #{clmodel_forward.1} parent=39 // pred_check_branch
        %232 = sbr.rel (%p230) target = $region44
      $region43: #{clmodel_forward.1} parent=39 // pred_region
        %s233 = smul.u32 16, %s15
        %p234 = scmp.lt.s32.totalorder %s233, 31
        %s235 = scalar_select %p234, %s233, 31
        %s236 = smul.addr %s235, 8
        %s237 = scalar_lea.vmem %s0, %s236
        %s238 = smul.u32 16, %s15
      $region44: #{clmodel_forward.1} parent=39 // pred_fallthru
        _
    $region40: #{clmodel_forward.1} parent=5 // pred_fallthru
      _
    %p239 = scmp.le.s32.totalorder 1, %s15
    %p240 = scmp.lt.s32.totalorder %s15, 3
    %p241 = pnand %p239, %p240
    %p242 = pneg %p241
    // Predicated region
    $region45: #{clmodel_forward.1} parent=5 // pred_check
      _
    $region46: #{clmodel_forward.1} parent=5 // pred_check_branch
      %244 = sbr.rel (%p241) target = $region48
    $region47: #{clmodel_forward.1} parent=5 // pred_region
      %s245 = ssub.s32 %s15, 1
      %s246 = smul.u32 16, %s20
      %p247 = scmp.lt.s32.totalorder %s246, 31
      %s248 = scalar_select %p247, %s246, 31
      %s249 = smul.addr %s248, 8
      %s250 = scalar_lea.vmem %s0, %s249
      %p251 = pneg %p41
      %p252 = pneg %p38
      %p253 = pneg %p62
      %p254 = pneg %p59
      %p255 = pneg %p83
      %p256 = pneg %p80
      %p257 = pneg %p104
      %p258 = pneg %p101
      %p259 = pneg %p125
      %p260 = pneg %p122
      %p261 = pneg %p146
      %p262 = pneg %p143
      %p263 = pneg %p167
      %p264 = pneg %p164
      %p265 = pneg %p193
      %p266 = pneg %p190
      %p267 = scmp.lt.s32.totalorder %s20, 1
      %s268 = scalar_select %p267, %s20, 1
      %s269 = scalar_lea.vmem %s7, %s268
      %s270 = smul.u32 16, %s20
      %p271 = scmp.lt.s32.totalorder %s270, 31
      %s272 = scalar_select %p271, %s270, 31
      %s273 = smul.addr %s272, 8
      %s274 = scalar_lea.vmem %s0, %s273
      %s275 = smul.u32 16, %s20
      %p276 = scmp.lt.s32.totalorder %s20, 1
      %s277 = scalar_select %p276, %s20, 1
      %s278 = scalar_lea.vmem %s7, %s277
      %v279 = vld [vmem:[%s274] sm:$0xff]
      %v280 = vld [vmem:[%s274 + $0x8] sm:$0xff]
      %v281 = vld [vmem:[%s274 + $0x10] sm:$0xff]
      %v282 = vld [vmem:[%s274 + $0x18] sm:$0xff]
      %v283 = vld [vmem:[%s274 + $0x20] sm:$0xff]
      %v284 = vld [vmem:[%s274 + $0x28] sm:$0xff]
      %v285 = vld [vmem:[%s274 + $0x30] sm:$0xff]
      %v286 = vld [vmem:[%s274 + $0x38] sm:$0xff]
      %v287 = vld [vmem:[%s274 + $0x40] sm:$0xff]
      %v288 = vld [vmem:[%s274 + $0x48] sm:$0xff]
      %v289 = vld [vmem:[%s274 + $0x50] sm:$0xff]
      %v290 = vld [vmem:[%s274 + $0x58] sm:$0xff]
      %v291 = vld [vmem:[%s274 + $0x60] sm:$0xff]
      %v292 = vld [vmem:[%s274 + $0x68] sm:$0xff]
      %v293 = vld [vmem:[%s274 + $0x70] sm:$0xff]
      %v294 = vld [vmem:[%s274 + $0x78] sm:$0xff]
      %v295 = vld [vmem:[%s1] sm:$0xff]
      %v296 = vld [vmem:[%s1 + $0x8] sm:$0xff]
      %v297 = vld [vmem:[%s1 + $0x10] sm:$0xff]
      %v298 = vld [vmem:[%s1 + $0x18] sm:$0xff]
      %v299 = vld [vmem:[%s1 + $0x20] sm:$0xff]
      %v300 = vld [vmem:[%s1 + $0x28] sm:$0xff]
      %v301 = vld [vmem:[%s1 + $0x30] sm:$0xff]
      %v302 = vld [vmem:[%s1 + $0x38] sm:$0xff]
      %v303 = vld [vmem:[%s2] sm:$0xff]
      %v304 = vld [vmem:[%s2 + $0x8] sm:$0xff]
      %v305 = vld [vmem:[%s2 + $0x10] sm:$0xff]
      %v306 = vld [vmem:[%s2 + $0x18] sm:$0xff]
      %v307 = vld [vmem:[%s2 + $0x20] sm:$0xff]
      %v308 = vld [vmem:[%s2 + $0x28] sm:$0xff]
      %v309 = vld [vmem:[%s2 + $0x30] sm:$0xff]
      %v310 = vld [vmem:[%s2 + $0x38] sm:$0xff]
      %312 = vset.pattern.permute.xlu0 0
      %313 = vperm.xlu0 %312, %v303
      %v314 = vpop.permute.xlu0 %313
      %317 = vset.pattern.permute.xlu0 0
      %318 = vperm.xlu0 %317, %v304
      %v319 = vpop.permute.xlu0 %318
      %322 = vset.pattern.permute.xlu0 0
      %323 = vperm.xlu0 %322, %v305
      %v324 = vpop.permute.xlu0 %323
      %327 = vset.pattern.permute.xlu0 0
      %328 = vperm.xlu0 %327, %v306
      %v329 = vpop.permute.xlu0 %328
      %332 = vset.pattern.permute.xlu0 0
      %333 = vperm.xlu0 %332, %v307
      %v334 = vpop.permute.xlu0 %333
      %337 = vset.pattern.permute.xlu0 0
      %338 = vperm.xlu0 %337, %v308
      %v339 = vpop.permute.xlu0 %338
      %342 = vset.pattern.permute.xlu0 0
      %343 = vperm.xlu0 %342, %v309
      %v344 = vpop.permute.xlu0 %343
      %347 = vset.pattern.permute.xlu0 0
      %348 = vperm.xlu0 %347, %v310
      %v349 = vpop.permute.xlu0 %348
      %vm351 = vcmask 261120
      %v353 = vsel %vm351, %v295, 0
      %v356 = vsel %vm351, %v296, 0
      %v359 = vsel %vm351, %v297, 0
      %v362 = vsel %vm351, %v298, 0
      %v365 = vsel %vm351, %v299, 0
      %v368 = vsel %vm351, %v300, 0
      %v371 = vsel %vm351, %v301, 0
      %v374 = vsel %vm351, %v302, 0
      %v377 = vsel %vm351, %v279, 0
      %v380 = vsel %vm351, %v280, 0
      %v383 = vsel %vm351, %v281, 0
      %v386 = vsel %vm351, %v282, 0
      %v389 = vsel %vm351, %v283, 0
      %v392 = vsel %vm351, %v284, 0
      %v395 = vsel %vm351, %v285, 0
      %v398 = vsel %vm351, %v286, 0
      %v401 = vsel %vm351, %v287, 0
      %v404 = vsel %vm351, %v288, 0
      %v407 = vsel %vm351, %v289, 0
      %v410 = vsel %vm351, %v290, 0
      %v413 = vsel %vm351, %v291, 0
      %v416 = vsel %vm351, %v292, 0
      %v419 = vsel %vm351, %v293, 0
      %v422 = vsel %vm351, %v294, 0
      %424 = vmatprep.subr.mxu0 0.0
      %425 = vmatpush1.xpose.msra.mxu0 %v377
      %426 = vmatprep.subr.mxu0 0.0
      %427 = vmatpush1.xpose.msra.mxu0 %v380
      %428 = vmatprep.subr.mxu0 0.0
      %429 = vmatpush1.xpose.msra.mxu0 %v383
      %430 = vmatprep.subr.mxu0 0.0
      %431 = vmatpush1.xpose.msra.mxu0 %v386
      %432 = vmatprep.subr.mxu0 0.0
      %433 = vmatpush1.xpose.msra.mxu0 %v389
      %434 = vmatprep.subr.mxu0 0.0
      %435 = vmatpush1.xpose.msra.mxu0 %v392
      %436 = vmatprep.subr.mxu0 0.0
      %437 = vmatpush1.xpose.msra.mxu0 %v395
      %438 = vmatprep.subr.mxu0 0.0
      %439 = vmatpush1.xpose.msra.mxu0 %v398
      %440 = vmatprep.subr.mxu0 0.0
      %441 = vmatpush1.xpose.msra.mxu0 %v401
      %442 = vmatprep.subr.mxu0 0.0
      %443 = vmatpush1.xpose.msra.mxu0 %v404
      %444 = vmatprep.subr.mxu0 0.0
      %445 = vmatpush1.xpose.msra.mxu0 %v407
      %446 = vmatprep.subr.mxu0 0.0
      %447 = vmatpush1.xpose.msra.mxu0 %v410
      %448 = vmatprep.subr.mxu0 0.0
      %449 = vmatpush1.xpose.msra.mxu0 %v413
      %450 = vmatprep.subr.mxu0 0.0
      %451 = vmatpush1.xpose.msra.mxu0 %v416
      %452 = vmatprep.subr.mxu0 0.0
      %453 = vmatpush1.xpose.msra.mxu0 %v419
      %454 = vmatprep.subr.mxu0 0.0
      %455 = vmatpush1.xpose.msra.mxu0 %v422
      %456 = vmatprep.subr.mxu0 0.0
      %457 = vmatpush1.xpose.msra.mxu0 0.0
      %458 = vmatprep.subr.mxu0 0.0
      %459 = vmatpush1.xpose.msra.mxu0 0.0
      %460 = vmatprep.subr.mxu0 0.0
      %461 = vmatpush1.xpose.msra.mxu0 0.0
      %462 = vmatprep.subr.mxu0 0.0
      %463 = vmatpush1.xpose.msra.mxu0 0.0
      %464 = vmatprep.subr.mxu0 0.0
      %465 = vmatpush1.xpose.msra.mxu0 0.0
      %466 = vmatprep.subr.mxu0 0.0
      %467 = vmatpush1.xpose.msra.mxu0 0.0
      %468 = vmatprep.subr.mxu0 0.0
      %469 = vmatpush1.xpose.msra.mxu0 0.0
      %470 = vmatprep.subr.mxu0 0.0
      %471 = vmatpush1.xpose.msra.mxu0 0.0
      %472 = vmatprep.subr.mxu0 0.0
      %473 = vmatpush1.xpose.msra.mxu0 0.0
      %474 = vmatprep.subr.mxu0 0.0
      %475 = vmatpush1.xpose.msra.mxu0 0.0
      %476 = vmatprep.subr.mxu0 0.0
      %477 = vmatpush1.xpose.msra.mxu0 0.0
      %478 = vmatprep.subr.mxu0 0.0
      %479 = vmatpush1.xpose.msra.mxu0 0.0
      %480 = vmatprep.subr.mxu0 0.0
      %481 = vmatpush1.xpose.msra.mxu0 0.0
      %482 = vmatprep.subr.mxu0 0.0
      %483 = vmatpush1.xpose.msra.mxu0 0.0
      %484 = vmatprep.subr.mxu0 0.0
      %485 = vmatpush1.xpose.msra.mxu0 0.0
      %486 = vmatprep.subr.mxu0 0.0
      %487 = vmatpush1.xpose.msra.mxu0 0.0
      %488 = vmatprep.mubr.f32.mxu0 0.0
      %489 = vmatmul.mubr.f32.gmra.mrb[0].mxu0 %v353
      %v490 = vpop.f32.mrb[0].mxu0
      %v491 = vadd.f32 %v314, %v490
      %v492 = vpop.f32.mrb[0].mxu0
      %493 = vmatprep.mubr.f32.mxu0 0.0
      %494 = vmatmul.mubr.f32.gmra.mrb[0].mxu0 %v356
      %v495 = vpop.f32.mrb[0].mxu0
      %v496 = vadd.f32 %v319, %v495
      %v497 = vpop.f32.mrb[0].mxu0
      %498 = vmatprep.mubr.f32.mxu0 0.0
      %499 = vmatmul.mubr.f32.gmra.mrb[0].mxu0 %v359
      %v500 = vpop.f32.mrb[0].mxu0
      %v501 = vadd.f32 %v324, %v500
      %v502 = vpop.f32.mrb[0].mxu0
      %503 = vmatprep.mubr.f32.mxu0 0.0
      %504 = vmatmul.mubr.f32.gmra.mrb[0].mxu0 %v362
      %v505 = vpop.f32.mrb[0].mxu0
      %v506 = vadd.f32 %v329, %v505
      %v507 = vpop.f32.mrb[0].mxu0
      %508 = vmatprep.mubr.f32.mxu0 0.0
      %509 = vmatmul.mubr.f32.gmra.mrb[0].mxu0 %v365
      %v510 = vpop.f32.mrb[0].mxu0
      %v511 = vadd.f32 %v334, %v510
      %v512 = vpop.f32.mrb[0].mxu0
      %513 = vmatprep.mubr.f32.mxu0 0.0
      %514 = vmatmul.mubr.f32.gmra.mrb[0].mxu0 %v368
      %v515 = vpop.f32.mrb[0].mxu0
      %v516 = vadd.f32 %v339, %v515
      %v517 = vpop.f32.mrb[0].mxu0
      %518 = vmatprep.mubr.f32.mxu0 0.0
      %519 = vmatmul.mubr.f32.gmra.mrb[0].mxu0 %v371
      %v520 = vpop.f32.mrb[0].mxu0
      %v521 = vadd.f32 %v344, %v520
      %v522 = vpop.f32.mrb[0].mxu0
      %523 = vmatprep.mubr.f32.mxu0 0.0
      %524 = vmatmul.mubr.f32.gmra.mrb[0].mxu0 %v374
      %v525 = vpop.f32.mrb[0].mxu0
      %v526 = vadd.f32 %v349, %v525
      %v527 = vpop.f32.mrb[0].mxu0
      %528 = vdwg.mxu0
      %v529 = vmax.f32 %v491, 0.0
      %v530 = vmax.f32 %v496, 0.0
      %v531 = vmax.f32 %v501, 0.0
      %v532 = vmax.f32 %v506, 0.0
      %v533 = vmax.f32 %v511, 0.0
      %v534 = vmax.f32 %v516, 0.0
      %v535 = vmax.f32 %v521, 0.0
      %v536 = vmax.f32 %v526, 0.0
      %v537 = vld [vmem:[%s3] sm:$0xff]
      %v538 = vld [vmem:[%s3 + $0x8] sm:$0xff]
      %v539 = vld [vmem:[%s3 + $0x10] sm:$0xff]
      %v540 = vld [vmem:[%s3 + $0x18] sm:$0xff]
      %v541 = vld [vmem:[%s4] sm:$0xff]
      %v542 = vld [vmem:[%s4 + $0x8] sm:$0xff]
      %v543 = vld [vmem:[%s4 + $0x10] sm:$0xff]
      %v544 = vld [vmem:[%s4 + $0x18] sm:$0xff]
      %546 = vset.pattern.permute.xlu0 0
      %547 = vperm.xlu0 %546, %v541
      %v548 = vpop.permute.xlu0 %547
      %551 = vset.pattern.permute.xlu0 0
      %552 = vperm.xlu0 %551, %v542
      %v553 = vpop.permute.xlu0 %552
      %556 = vset.pattern.permute.xlu0 0
      %557 = vperm.xlu0 %556, %v543
      %v558 = vpop.permute.xlu0 %557
      %561 = vset.pattern.permute.xlu0 0
      %562 = vperm.xlu0 %561, %v544
      %v563 = vpop.permute.xlu0 %562
      %vm565 = vcmask 523264
      %v567 = vsel %vm565, %v537, 0
      %v570 = vsel %vm565, %v538, 0
      %v573 = vsel %vm565, %v539, 0
      %v576 = vsel %vm565, %v540, 0
      %578 = vmatprep.subr.mxu0 0.0
      %579 = vmatpush1.msra.mxu0 %v529
      %580 = vmatprep.subr.mxu0 0.0
      %581 = vmatpush1.msra.mxu0 %v530
      %582 = vmatprep.subr.mxu0 0.0
      %583 = vmatpush1.msra.mxu0 %v531
      %584 = vmatprep.subr.mxu0 0.0
      %585 = vmatpush1.msra.mxu0 %v532
      %586 = vmatprep.subr.mxu0 0.0
      %587 = vmatpush1.msra.mxu0 %v533
      %588 = vmatprep.subr.mxu0 0.0
      %589 = vmatpush1.msra.mxu0 %v534
      %590 = vmatprep.subr.mxu0 0.0
      %591 = vmatpush1.msra.mxu0 %v535
      %592 = vmatprep.subr.mxu0 0.0
      %593 = vmatpush1.msra.mxu0 %v536
      %594 = vmatprep.subr.mxu0 0.0
      %595 = vmatpush1.msra.mxu0 0.0
      %596 = vmatprep.subr.mxu0 0.0
      %597 = vmatpush1.msra.mxu0 0.0
      %598 = vmatprep.subr.mxu0 0.0
      %599 = vmatpush1.msra.mxu0 0.0
      %600 = vmatprep.subr.mxu0 0.0
      %601 = vmatpush1.msra.mxu0 0.0
      %602 = vmatprep.subr.mxu0 0.0
      %603 = vmatpush1.msra.mxu0 0.0
      %604 = vmatprep.subr.mxu0 0.0
      %605 = vmatpush1.msra.mxu0 0.0
      %606 = vmatprep.subr.mxu0 0.0
      %607 = vmatpush1.msra.mxu0 0.0
      %608 = vmatprep.subr.mxu0 0.0
      %609 = vmatpush1.msra.mxu0 0.0
      %610 = vmatprep.subr.mxu0 0.0
      %611 = vmatpush1.msra.mxu0 0.0
      %612 = vmatprep.subr.mxu0 0.0
      %613 = vmatpush1.msra.mxu0 0.0
      %614 = vmatprep.subr.mxu0 0.0
      %615 = vmatpush1.msra.mxu0 0.0
      %616 = vmatprep.subr.mxu0 0.0
      %617 = vmatpush1.msra.mxu0 0.0
      %618 = vmatprep.subr.mxu0 0.0
      %619 = vmatpush1.msra.mxu0 0.0
      %620 = vmatprep.subr.mxu0 0.0
      %621 = vmatpush1.msra.mxu0 0.0
      %622 = vmatprep.subr.mxu0 0.0
      %623 = vmatpush1.msra.mxu0 0.0
      %624 = vmatprep.subr.mxu0 0.0
      %625 = vmatpush1.msra.mxu0 0.0
      %626 = vmatprep.subr.mxu0 0.0
      %627 = vmatpush1.msra.mxu0 0.0
      %628 = vmatprep.subr.mxu0 0.0
      %629 = vmatpush1.msra.mxu0 0.0
      %630 = vmatprep.subr.mxu0 0.0
      %631 = vmatpush1.msra.mxu0 0.0
      %632 = vmatprep.subr.mxu0 0.0
      %633 = vmatpush1.msra.mxu0 0.0
      %634 = vmatprep.subr.mxu0 0.0
      %635 = vmatpush1.msra.mxu0 0.0
      %636 = vmatprep.subr.mxu0 0.0
      %637 = vmatpush1.msra.mxu0 0.0
      %638 = vmatprep.subr.mxu0 0.0
      %639 = vmatpush1.msra.mxu0 0.0
      %640 = vmatprep.subr.mxu0 0.0
      %641 = vmatpush1.msra.mxu0 0.0
      %642 = vmatprep.mubr.f32.mxu0 0.0
      %643 = vmatmul.mubr.f32.gmra.mrb[0].mxu0 %v567
      %v644 = vpop.f32.mrb[0].mxu0
      %v645 = vadd.f32 %v548, %v644
      %v646 = vpop.f32.mrb[0].mxu0
      %647 = vmatprep.mubr.f32.mxu0 0.0
      %648 = vmatmul.mubr.f32.gmra.mrb[0].mxu0 %v570
      %v649 = vpop.f32.mrb[0].mxu0
      %v650 = vadd.f32 %v553, %v649
      %v651 = vpop.f32.mrb[0].mxu0
      %652 = vmatprep.mubr.f32.mxu0 0.0
      %653 = vmatmul.mubr.f32.gmra.mrb[0].mxu0 %v573
      %v654 = vpop.f32.mrb[0].mxu0
      %v655 = vadd.f32 %v558, %v654
      %v656 = vpop.f32.mrb[0].mxu0
      %657 = vmatprep.mubr.f32.mxu0 0.0
      %658 = vmatmul.mubr.f32.gmra.mrb[0].mxu0 %v576
      %v659 = vpop.f32.mrb[0].mxu0
      %v660 = vadd.f32 %v563, %v659
      %v661 = vpop.f32.mrb[0].mxu0
      %662 = vdwg.mxu0
      %v663 = vmax.f32 %v645, 0.0
      %v664 = vmax.f32 %v650, 0.0
      %v665 = vmax.f32 %v655, 0.0
      %v666 = vmax.f32 %v660, 0.0
      %v667 = vld [vmem:[%s5] sm:$0xff]
      %v668 = vld [vmem:[%s5 + $0x8] sm:$0xff]
      %v669 = vld [vmem:[%s5 + $0x10] sm:$0xff]
      %v670 = vld [vmem:[%s5 + $0x18] sm:$0xff]
      %672 = vset.pattern.permute.xlu0 0
      %673 = vperm.xlu0 %672, %v667
      %v674 = vpop.permute.xlu0 %673
      %677 = vset.pattern.permute.xlu0 0
      %678 = vperm.xlu0 %677, %v668
      %v679 = vpop.permute.xlu0 %678
      %682 = vset.pattern.permute.xlu0 0
      %683 = vperm.xlu0 %682, %v669
      %v684 = vpop.permute.xlu0 %683
      %687 = vset.pattern.permute.xlu0 0
      %688 = vperm.xlu0 %687, %v670
      %v689 = vpop.permute.xlu0 %688
      %v691 = vmul.f32 %v674, %v663
      %v692 = vmul.f32 %v679, %v664
      %v693 = vmul.f32 %v684, %v665
      %v694 = vmul.f32 %v689, %v666
      %v695 = vadd.f32 %v691, %v692
      %v696 = vadd.f32 %v695, %v693
      %v697 = vadd.f32 %v696, %v694
      %v698 = vrot.slane %v697, 4
      %v699 = vadd.f32 %v697, %v698
      %v700 = vrot.slane %v699, 2
      %v701 = vadd.f32 %v699, %v700
      %v702 = vrot.slane %v701, 1
      %v703 = vadd.f32 %v701, %v702
      %v704 = vld [vmem:[#allocation2] sm:$0x1]
      %706 = vset.pattern.permute.xlu0 0
      %707 = vperm.xlu0 %706, %v704
      %v708 = vpop.permute.xlu0 %707
      %v710 = vlaneseq
      %v711 = vshrl.u32 %v710, 7
      %v712 = vsub.s32 0, %v711
      %v713 = vrot.slane %v708, %v712
      %v714 = vadd.f32 %v703, %v713
      %v715 = vsub.f32 0.0, %v714
      %v716 = vmul.f32 %v715, 1.442695
      %v717 = vpow.pop %v716
      %v718 = vadd.f32 %v717, 1.0
      %v719 = vrcp.pop %v718
      %720 = vst [vmem:[%s278] sm:$0x1] %v719
      %p721 = scmp.lt.s32.totalorder %s20, 1
      %s722 = scalar_select %p721, %s20, 1
      %s723 = scalar_lea.vmem %s7, %s722
      // Predicated region
      $region49: #{clmodel_forward.1} parent=47 // pred_check
        %p724 = pneg %p190
      $region50: #{clmodel_forward.1} parent=47 // pred_check_branch
        %726 = sbr.rel (%p724) target = $region52
      $region51: #{clmodel_forward.1} parent=47 // pred_region
        _
      $region52: #{clmodel_forward.1} parent=47 // pred_fallthru
        _
    $region48: #{clmodel_forward.1} parent=5 // pred_fallthru
      _
    %p727 = scmp.le.s32.totalorder 2, %s15
    // Predicated region
    $region53: #{clmodel_forward.1} parent=5 // pred_check
      %p728 = pneg %p727
    $region54: #{clmodel_forward.1} parent=5 // pred_check_branch
      %730 = sbr.rel (%p728) target = $region56
    $region55: #{clmodel_forward.1} parent=5 // pred_region
      %s731 = ssub.s32 %s15, 2
      // Predicated region
      $region57: #{clmodel_forward.1} parent=55 // pred_check
        %p732 = pneg %p196
      $region58: #{clmodel_forward.1} parent=55 // pred_check_branch
        %734 = sbr.rel (%p732) target = $region60
      $region59: #{clmodel_forward.1} parent=55 // pred_region
        %p735 = scmp.lt.s32.totalorder %s21, 1
        %s736 = scalar_select %p735, %s21, 1
        %s737 = scalar_lea.vmem %s7, %s736
      $region60: #{clmodel_forward.1} parent=55 // pred_fallthru
        _
    $region56: #{clmodel_forward.1} parent=5 // pred_fallthru
      _
  $region6: #{clmodel_forward.1} parent=0 // loop_footer
    %s19 = sadd.s32 1, %s15
  $region7: #{clmodel_forward.1} parent=0 // loop_footer_branch
    %14 = sbr.rel target = $region3
  $region8: #{clmodel_forward.1} parent=0 // loop_exit
    _

</llo_original>
